<compile_context>
chip_gen: v7x
topology: tpu7x:2x2x1
jax: 0.10.0
libtpu: 0.0.40
codegen_flags: <defaults>
</compile_context>

<pallas_src>
import functools

import jax
import jax.numpy as jnp
from jax.experimental import pallas as pl
from jax.experimental.pallas import tpu as pltpu

_LANE = 128
_SUBLANE = 8
_VMEM_LIMIT_BYTES = 32 * 1024 * 1024       # fits v5e/v6e and v7x scoped VMEM
_FUSED_VMEM_BUDGET = 24 * 1024 * 1024      # headroom under the 32 MiB limit


# ------------------------------ small helpers ------------------------------ #

def _round_up(n, m):
    return ((n + m - 1) // m) * m


def _pick_tile(dim, cap):
    """Largest multiple of 128 that divides `dim` (dim is a 128-multiple)."""
    t = min(dim, cap)
    t = (t // _LANE) * _LANE
    while dim % t != 0:
        t -= _LANE
    return max(t, _LANE)


def _choose_bm(b_pad, cap=512):
    """Largest multiple of 8 dividing b_pad; prefer a choice that yields
    >= 2 grid steps (so the batch grid can shard across v7x's two cores)
    as long as it does not require adding padding."""
    cands = [r for r in range(_SUBLANE, min(b_pad, cap) + 1, _SUBLANE)
             if b_pad % r == 0]
    bm = max(cands)
    if b_pad // bm < 2:
        two_step = [r for r in cands if b_pad // r >= 2]
        if two_step:
            bm = max(two_step)
    return bm


# ------------------------------ Pallas kernels ----------------------------- #

def _fused_kernel(*refs, n_layers):
    """All layers fused on one (bm, F_in) batch tile; intermediate activations
    never leave vregs/VMEM."""
    x_ref = refs[0]
    o_ref = refs[-1]
    h = x_ref[...].astype(jnp.float32)
    for i in range(n_layers):
        w_ref = refs[1 + 2 * i]
        b_ref = refs[2 + 2 * i]
        h = jnp.dot(h.astype(w_ref.dtype), w_ref[...],
                    preferred_element_type=jnp.float32)
        h = h + b_ref[...]                     # (bm, out) + (1, out)
        if i < n_layers - 1:
            h = jnp.tanh(h)                    # f32 tanh (EUP)
    o_ref[...] = h.astype(o_ref.dtype)


def _linear_tiled_kernel(x_ref, w_ref, b_ref, o_ref, acc_ref, *, apply_tanh):
    """One Linear layer with K-reduction grid axis and f32 VMEM accumulator."""
    k = pl.program_id(2)

    @pl.when(k == 0)
    def _():
        acc_ref[...] = jnp.zeros_like(acc_ref)

    acc_ref[...] += jnp.dot(x_ref[...].astype(w_ref.dtype), w_ref[...],
                            preferred_element_type=jnp.float32)

    @pl.when(k == pl.num_programs(2) - 1)
    def _():
        y = acc_ref[...] + b_ref[...]
        if apply_tanh:
            y = jnp.tanh(y)
        o_ref[...] = y.astype(o_ref.dtype)


# ------------------------------ pallas_call wrappers ----------------------- #

def _fused_forward(x_pad, layers, bm):
    b_pad, f_in = x_pad.shape
    f_out = layers[-1][0].shape[1]
    n_layers = len(layers)

    in_specs = [pl.BlockSpec((bm, f_in), lambda i: (i, 0))]
    args = [x_pad]
    flops = 0
    weight_bytes = 0
    for (w_t, b2d) in layers:
        fi, fo = w_t.shape
        # Constant block index -> fetched once, VMEM-resident across the grid.
        in_specs.append(pl.BlockSpec((fi, fo), lambda i: (0, 0)))
        in_specs.append(pl.BlockSpec((1, fo), lambda i: (0, 0)))
        args += [w_t, b2d]
        flops += 2 * b_pad * fi * fo
        weight_bytes += fi * fo * w_t.dtype.itemsize + fo * 4
    transcendentals = b_pad * sum(w.shape[1] for (w, _) in layers[:-1])
    bytes_accessed = weight_bytes + 4 * b_pad * (f_in + f_out)

    kernel = functools.partial(_fused_kernel, n_layers=n_layers)
    return pl.pallas_call(
        kernel,
        out_shape=jax.ShapeDtypeStruct((b_pad, f_out), jnp.float32),
        grid_spec=pltpu.PrefetchScalarGridSpec(
            num_scalar_prefetch=0,
            grid=(b_pad // bm,),
            in_specs=in_specs,
            out_specs=pl.BlockSpec((bm, f_out), lambda i: (i, 0)),
        ),
        compiler_params=pltpu.CompilerParams(
            dimension_semantics=("parallel",),
            vmem_limit_bytes=_VMEM_LIMIT_BYTES),
        cost_estimate=pl.CostEstimate(
            flops=flops, transcendentals=transcendentals,
            bytes_accessed=bytes_accessed),
    )(*args)


def _linear_tiled(x_pad, w_t, b2d, *, apply_tanh, bm, bn_cap=512, bk_cap=512):
    b_pad, f_in = x_pad.shape
    f_in_w, f_out = w_t.shape
    assert f_in == f_in_w
    bn = _pick_tile(f_out, bn_cap)
    bk = _pick_tile(f_in, bk_cap)

    flops = 2 * b_pad * f_in * f_out
    transcendentals = b_pad * f_out if apply_tanh else 0
    bytes_accessed = (b_pad * f_in * 4 + f_in * f_out * w_t.dtype.itemsize
                      + f_out * 4 + b_pad * f_out * 4)

    kernel = functools.partial(_linear_tiled_kernel, apply_tanh=apply_tanh)
    return pl.pallas_call(
        kernel,
        out_shape=jax.ShapeDtypeStruct((b_pad, f_out), jnp.float32),
        grid_spec=pltpu.PrefetchScalarGridSpec(
            num_scalar_prefetch=0,
            grid=(b_pad // bm, f_out // bn, f_in // bk),
            in_specs=[
                pl.BlockSpec((bm, bk), lambda i, j, k: (i, k)),
                pl.BlockSpec((bk, bn), lambda i, j, k: (k, j)),
                pl.BlockSpec((1, bn), lambda i, j, k: (0, j)),
            ],
            out_specs=pl.BlockSpec((bm, bn), lambda i, j, k: (i, j)),
            scratch_shapes=[pltpu.VMEM((bm, bn), jnp.float32)],
        ),
        compiler_params=pltpu.CompilerParams(
            dimension_semantics=("parallel", "parallel", "arbitrary"),
            vmem_limit_bytes=_VMEM_LIMIT_BYTES),
        cost_estimate=pl.CostEstimate(
            flops=flops, transcendentals=transcendentals,
            bytes_accessed=bytes_accessed),
    )(x_pad, w_t, b2d)


# --------------------------- Autoencoder wrapper --------------------------- #

def prepare_params(params, matmul_dtype=jnp.float32):
    """One-time layout prep (call outside the hot path):
    transpose PyTorch (out, in) weights to (in, out), zero-pad all feature
    dims to multiples of 128 (lane-dense), reshape biases to (1, out_pad)."""
    dims = [params[0][0].shape[1]] + [w.shape[0] for (w, _) in params]
    dims_pad = [_round_up(d, _LANE) for d in dims]
    layers = []
    for i, (w, b) in enumerate(params):
        f_out, f_in = w.shape
        fi_p, fo_p = dims_pad[i], dims_pad[i + 1]
        w_t = jnp.zeros((fi_p, fo_p), jnp.float32).at[:f_in, :f_out].set(w.T)
        w_t = w_t.astype(matmul_dtype)
        b2d = jnp.zeros((1, fo_p), jnp.float32).at[0, :f_out].set(b)
        layers.append((w_t, b2d))
    return {"dims": dims, "dims_pad": dims_pad, "layers": layers}


def autoencoder_forward(x, prepared, *, force_tiled=False):
    """Forward pass: tanh after every layer except the last (matches module)."""
    dims = prepared["dims"]
    dims_pad = prepared["dims_pad"]
    layers = prepared["layers"]
    n_layers = len(layers)

    batch, f_in = x.shape
    assert f_in == dims[0]

    # Pad batch to a sublane multiple and features to the lane-padded width.
    # Padded rows/cols are zero and sliced away at the end.
    b_pad = _round_up(batch, _SUBLANE)
    x_pad = jnp.pad(x.astype(jnp.float32),
                    ((0, b_pad - batch), (0, dims_pad[0] - f_in)))

    bm = _choose_bm(b_pad)

    # Conservative (double-buffered) VMEM footprint of the fused, weight-
    # resident config; fall back to the K/N-tiled per-layer path if too big.
    weight_bytes = sum(w.size * w.dtype.itemsize + b.size * 4
                       for (w, b) in layers)
    act_bytes = 4 * bm * (dims_pad[0] + dims_pad[-1] + max(dims_pad))
    fused_ok = (not force_tiled) and (
        2 * weight_bytes + 2 * act_bytes <= _FUSED_VMEM_BUDGET)

    if fused_ok:
        out_pad = _fused_forward(x_pad, layers, bm)
    else:
        h = x_pad
        for i, (w_t, b2d) in enumerate(layers):
            h = _linear_tiled(h, w_t, b2d,
                              apply_tanh=(i < n_layers - 1), bm=bm)
        out_pad = h
    return out_pad[:batch, :dims[-1]]


def init_autoencoder_params(key, n_features, sizes=None):
    """Deterministic init mimicking the module: xavier-normal weights,
    normal(0, out_features^{-1/2}) biases. Weights in PyTorch (out, in)."""
    sizes = [n_features] if sizes is None else list(sizes)
    dims = [n_features] + sizes + [n_features]
    params = []
    for s_in, s_out in zip(dims, dims[1:]):
        key, kw, kb = jax.random.split(key, 3)
        w_std = (2.0 / (s_in + s_out)) ** 0.5          # xavier normal
        W = w_std * jax.random.normal(kw, (s_out, s_in), jnp.float32)
        b_std = s_out ** (-0.5)
        b = b_std * jax.random.normal(kb, (s_out,), jnp.float32)
        params.append((W, b))
    return params


# Pure-JAX reference (same math, no Pallas).
def autoencoder_ref(x, params):
    n_layers = len(params)
    for i, (W, b) in enumerate(params):
        x = x @ W.T + b
        if i < n_layers - 1:
            x = jnp.tanh(x)
    return x

# TODO(synk): eval_train's Adam update / backward pass and the (de)serialization
# helpers are host-side training utilities, not part of the forward kernel.


# --------------------------------- main ----------------------------------- #

if __name__ == "__main__":
    key = jax.random.PRNGKey(0)
    batch, n_features = 8, 32

    kx, kp = jax.random.split(key)
    x = jax.random.normal(kx, (batch, n_features), jnp.float32)
    params = init_autoencoder_params(kp, n_features)   # default sizes -> 2 layers
    prepared = prepare_params(params)                  # one-time transpose + pad

    ref = autoencoder_ref(x, params)

    # Fused (single pallas_call) path.
    out = jax.block_until_ready(autoencoder_forward(x, prepared))
    assert out.shape == (batch, n_features)
    assert jnp.allclose(out, ref, atol=1e-5, rtol=1e-5)

    # K/N-tiled fallback path (used automatically for large n_features).
    out_tiled = jax.block_until_ready(
        autoencoder_forward(x, prepared, force_tiled=True))
    assert jnp.allclose(out_tiled, ref, atol=1e-5, rtol=1e-5)

    print("KERNEL_OK")
</pallas_src>

<mosaic_0001>
module attributes {stable_mosaic.version = 11 : i64} {
  func.func @_fused_kernel(%arg0: i32, %arg1: memref<8x128xf32, #tpu.memory_space<vmem>>, %arg2: memref<128x128xf32, #tpu.memory_space<vmem>>, %arg3: memref<1x128xf32, #tpu.memory_space<vmem>>, %arg4: memref<128x128xf32, #tpu.memory_space<vmem>>, %arg5: memref<1x128xf32, #tpu.memory_space<vmem>>, %arg6: memref<8x128xf32, #tpu.memory_space<vmem>>) attributes {dimension_semantics = [#tpu.dimension_semantics<parallel>], iteration_bounds = array<i64: 1>, scalar_prefetch = 0 : i64, scratch_operands = 0 : i64, tpu.core_type = #tpu.core_type<tc>, window_params = [{transform_indices = @transform_0, window_bounds = array<i64: 8, 128>}, {pipeline_mode = #tpu.pipeline_mode<synchronous>, transform_indices = @transform_1, window_bounds = array<i64: 128, 128>}, {pipeline_mode = #tpu.pipeline_mode<synchronous>, transform_indices = @transform_2, window_bounds = array<i64: 1, 128>}, {pipeline_mode = #tpu.pipeline_mode<synchronous>, transform_indices = @transform_3, window_bounds = array<i64: 128, 128>}, {pipeline_mode = #tpu.pipeline_mode<synchronous>, transform_indices = @transform_4, window_bounds = array<i64: 1, 128>}, {transform_indices = @transform_5, window_bounds = array<i64: 8, 128>}]} {
    %c0 = arith.constant 0 : index
    %c0_0 = arith.constant 0 : index
    %0 = vector.load %arg1[%c0, %c0_0] : memref<8x128xf32, #tpu.memory_space<vmem>>, vector<8x128xf32>
    %c0_1 = arith.constant 0 : index
    %c0_2 = arith.constant 0 : index
    %1 = vector.load %arg2[%c0_1, %c0_2] : memref<128x128xf32, #tpu.memory_space<vmem>>, vector<128x128xf32>
    %cst = arith.constant dense<0.000000e+00> : vector<8x128xf32>
    %2 = tpu.matmul %0, %1, %cst {dimension_numbers = #tpu.dot_dimension_numbers<[1], [0], [0], [1], [0, 0, 1, 1], [], []>} : vector<8x128xf32>, vector<128x128xf32>, vector<8x128xf32> -> vector<8x128xf32>
    %c0_3 = arith.constant 0 : index
    %c0_4 = arith.constant 0 : index
    %3 = vector.load %arg3[%c0_3, %c0_4] : memref<1x128xf32, #tpu.memory_space<vmem>>, vector<1x128xf32>
    %4 = vector.broadcast %3 : vector<1x128xf32> to vector<8x128xf32>
    %5 = arith.addf %2, %4 : vector<8x128xf32>
    %6 = math.tanh %5 : vector<8x128xf32>
    %c0_5 = arith.constant 0 : index
    %c0_6 = arith.constant 0 : index
    %7 = vector.load %arg4[%c0_5, %c0_6] : memref<128x128xf32, #tpu.memory_space<vmem>>, vector<128x128xf32>
    %cst_7 = arith.constant dense<0.000000e+00> : vector<8x128xf32>
    %8 = tpu.matmul %6, %7, %cst_7 {dimension_numbers = #tpu.dot_dimension_numbers<[1], [0], [0], [1], [0, 0, 1, 1], [], []>} : vector<8x128xf32>, vector<128x128xf32>, vector<8x128xf32> -> vector<8x128xf32>
    %c0_8 = arith.constant 0 : index
    %c0_9 = arith.constant 0 : index
    %9 = vector.load %arg5[%c0_8, %c0_9] : memref<1x128xf32, #tpu.memory_space<vmem>>, vector<1x128xf32>
    %10 = vector.broadcast %9 : vector<1x128xf32> to vector<8x128xf32>
    %11 = arith.addf %8, %10 : vector<8x128xf32>
    %c0_10 = arith.constant 0 : index
    %c0_11 = arith.constant 0 : index
    %12 = vector.load %arg6[%c0_10, %c0_11] : memref<8x128xf32, #tpu.memory_space<vmem>>, vector<8x128xf32>
    tpu.vector_store %arg6[%c0_10, %c0_11], %11 {strides = array<i32>} : memref<8x128xf32, #tpu.memory_space<vmem>>, vector<8x128xf32>,
    return
  }
  func.func @transform_0(%arg0: i32) -> (i32, i32) {
    %c0_i32 = arith.constant 0 : i32
    %c0_i32_0 = arith.constant 0 : i32
    return %arg0, %c0_i32 : i32, i32
  }
  func.func @transform_1(%arg0: i32) -> (i32, i32) {
    %c0_i32 = arith.constant 0 : i32
    %c0_i32_0 = arith.constant 0 : i32
    %c0_i32_1 = arith.constant 0 : i32
    return %c0_i32, %c0_i32_0 : i32, i32
  }
  func.func @transform_2(%arg0: i32) -> (i32, i32) {
    %c0_i32 = arith.constant 0 : i32
    %c0_i32_0 = arith.constant 0 : i32
    %c0_i32_1 = arith.constant 0 : i32
    return %c0_i32, %c0_i32_0 : i32, i32
  }
  func.func @transform_3(%arg0: i32) -> (i32, i32) {
    %c0_i32 = arith.constant 0 : i32
    %c0_i32_0 = arith.constant 0 : i32
    %c0_i32_1 = arith.constant 0 : i32
    return %c0_i32, %c0_i32_0 : i32, i32
  }
  func.func @transform_4(%arg0: i32) -> (i32, i32) {
    %c0_i32 = arith.constant 0 : i32
    %c0_i32_0 = arith.constant 0 : i32
    %c0_i32_1 = arith.constant 0 : i32
    return %c0_i32, %c0_i32_0 : i32, i32
  }
  func.func @transform_5(%arg0: i32) -> (i32, i32) {
    %c0_i32 = arith.constant 0 : i32
    %c0_i32_0 = arith.constant 0 : i32
    return %arg0, %c0_i32 : i32, i32
  }
}

</mosaic_0001>

<llo_original>
// kernel: tpu_custom_call.1
$region0: #{tpu_custom_call.1}
  #allocation0 [shape = 'u32[]', space=smem, size = 0x4, offset = 0x4, fixed_abs, tag = 'smem constant byte address 0x4 - core index']
  #allocation1 [shape = 'u32[144,128]{1,0:T(1,128)}', space=vmem, size = 0x12000, scoped, tag = 'internal scratch']
  %s0 = inlined_call_operand.hbm [shape: f32[8,128], index: 0, kind: input, shape index: {}]
  %s1 = inlined_call_operand.hbm [shape: f32[128,128], index: 1, kind: input, shape index: {}]
  %s2 = inlined_call_operand.vmem [shape: f32[1,128], index: 2, kind: input, shape index: {}]
  %s3 = inlined_call_operand.hbm [shape: f32[128,128], index: 3, kind: input, shape index: {}]
  %s4 = inlined_call_operand.vmem [shape: f32[1,128], index: 4, kind: input, shape index: {}]
  %s5 = inlined_call_operand.hbm [shape: f32[8,128], index: 5, kind: output, shape index: {}]
  %s6 = sld [smem:[#allocation0]]
  $region42: #{tpu_custom_call.1} parent=0
    _
  %s8 = ssub.s32 1, %s6
  %s9 = scalar_select 0, %s8, %s6
  $region1: #{tpu_custom_call.1} parent=0
    #allocation2 [shape = 'u8[4096]{0}', space=vmem, size = 0x1000, scoped, tag = 'input window, operand 0, single buffered']
    #allocation3 [shape = 's32[1]{0}', space=sflag, size = 0x4, scoped, tag = 'scoped memory for tpu_custom_call.1']
    #allocation4 [shape = 's32[1]{0}', space=sflag, size = 0x4, scoped, tag = 'scoped memory for tpu_custom_call.1']
    #allocation5 [shape = 'u8[65536]{0}', space=vmem, size = 0x10000, scoped, tag = 'input window, operand 1, single buffered']
    #allocation6 [shape = 's32[1]{0}', space=sflag, size = 0x4, scoped, tag = 'scoped memory for tpu_custom_call.1']
    #allocation7 [shape = 'u8[65536]{0}', space=vmem, size = 0x10000, scoped, tag = 'input window, operand 3, single buffered']
    #allocation8 [shape = 'u8[4096]{0}', space=vmem, size = 0x1000, scoped, tag = 'output window, operand 0, single buffered']
    %10 = vsyncpa [#allocation3], 0
    %11 = vsyncpa [#allocation6], 0
    %12 = vsyncpa [#allocation4], 0
    // Predicated region
    $region2: #{tpu_custom_call.1} parent=1 // pred_check
      _
    $region3: #{tpu_custom_call.1} parent=1 // pred_check_branch
      %14 = sbr.rel (0) target = $region5
    $region4: #{tpu_custom_call.1} parent=1 // pred_region
      %s16 = ssub.s32 128, 128
      %17 = vsyncadd [#allocation3], %s16
      %s19 = sshll.u32 [#allocation2], 4
      %s20 = int_to_ptr.vmem [resolvable:$true] %s19
      %22 = dma.hbm_to_vmem [thread:$0]  %s0, 128, %s20, [#allocation3]
    $region5: #{tpu_custom_call.1} parent=1 // pred_fallthru
      _
    // Predicated region
    $region6: #{tpu_custom_call.1} parent=1 // pred_check
      _
    $region7: #{tpu_custom_call.1} parent=1 // pred_check_branch
      %24 = sbr.rel (0) target = $region9
    $region8: #{tpu_custom_call.1} parent=1 // pred_region
      %s26 = ssub.s32 2048, 2048
      %27 = vsyncadd [#allocation6], %s26
      %s28 = sshll.u32 [#allocation5], 4
      %s29 = int_to_ptr.vmem [resolvable:$true] %s28
      %34 = dma.hbm_to_vmem [thread:$0]  %s1, 2048, %s29, [#allocation6], 128, 128, 8
    $region9: #{tpu_custom_call.1} parent=1 // pred_fallthru
      _
    // Predicated region
    $region10: #{tpu_custom_call.1} parent=1 // pred_check
      _
    $region11: #{tpu_custom_call.1} parent=1 // pred_check_branch
      %36 = sbr.rel (0) target = $region13
    $region12: #{tpu_custom_call.1} parent=1 // pred_region
      _
    $region13: #{tpu_custom_call.1} parent=1 // pred_fallthru
      _
    // Predicated region
    $region14: #{tpu_custom_call.1} parent=1 // pred_check
      _
    $region15: #{tpu_custom_call.1} parent=1 // pred_check_branch
      %38 = sbr.rel (0) target = $region17
    $region16: #{tpu_custom_call.1} parent=1 // pred_region
      %s40 = ssub.s32 2048, 2048
      %41 = vsyncadd [#allocation6], %s40
      %s42 = sshll.u32 [#allocation7], 4
      %s43 = int_to_ptr.vmem [resolvable:$true] %s42
      %48 = dma.hbm_to_vmem [thread:$0]  %s3, 2048, %s43, [#allocation6], 128, 128, 8
    $region17: #{tpu_custom_call.1} parent=1 // pred_fallthru
      _
    // Predicated region
    $region18: #{tpu_custom_call.1} parent=1 // pred_check
      _
    $region19: #{tpu_custom_call.1} parent=1 // pred_check_branch
      %50 = sbr.rel (0) target = $region21
    $region20: #{tpu_custom_call.1} parent=1 // pred_region
      _
    $region21: #{tpu_custom_call.1} parent=1 // pred_fallthru
      _
    // Predicated region
    $region22: #{tpu_custom_call.1} parent=1 // pred_check
      _
    $region23: #{tpu_custom_call.1} parent=1 // pred_check_branch
      %52 = sbr.rel (0) target = $region25
    $region24: #{tpu_custom_call.1} parent=1 // pred_region
      %53 = dma.done [#allocation3], 128
    $region25: #{tpu_custom_call.1} parent=1 // pred_fallthru
      _
    // Predicated region
    $region26: #{tpu_custom_call.1} parent=1 // pred_check
      _
    $region27: #{tpu_custom_call.1} parent=1 // pred_check_branch
      %55 = sbr.rel (0) target = $region29
    $region28: #{tpu_custom_call.1} parent=1 // pred_region
      %56 = dma.done [#allocation6], 2048
    $region29: #{tpu_custom_call.1} parent=1 // pred_fallthru
      _
    // Predicated region
    $region30: #{tpu_custom_call.1} parent=1 // pred_check
      _
    $region31: #{tpu_custom_call.1} parent=1 // pred_check_branch
      %58 = sbr.rel (0) target = $region33
    $region32: #{tpu_custom_call.1} parent=1 // pred_region
      %59 = dma.done [#allocation6], 2048
    $region33: #{tpu_custom_call.1} parent=1 // pred_fallthru
      _
    %v60 = vld [vmem:[#allocation2] sm:$0xff]
    %v61 = vld [vmem:[#allocation5] sm:$0xff]
    %v62 = vld [vmem:[#allocation5 + $0x8] sm:$0xff]
    %v63 = vld [vmem:[#allocation5 + $0x10] sm:$0xff]
    %v64 = vld [vmem:[#allocation5 + $0x18] sm:$0xff]
    %v65 = vld [vmem:[#allocation5 + $0x20] sm:$0xff]
    %v66 = vld [vmem:[#allocation5 + $0x28] sm:$0xff]
    %v67 = vld [vmem:[#allocation5 + $0x30] sm:$0xff]
    %v68 = vld [vmem:[#allocation5 + $0x38] sm:$0xff]
    %v69 = vld [vmem:[#allocation5 + $0x40] sm:$0xff]
    %v70 = vld [vmem:[#allocation5 + $0x48] sm:$0xff]
    %v71 = vld [vmem:[#allocation5 + $0x50] sm:$0xff]
    %v72 = vld [vmem:[#allocation5 + $0x58] sm:$0xff]
    %v73 = vld [vmem:[#allocation5 + $0x60] sm:$0xff]
    %v74 = vld [vmem:[#allocation5 + $0x68] sm:$0xff]
    %v75 = vld [vmem:[#allocation5 + $0x70] sm:$0xff]
    %v76 = vld [vmem:[#allocation5 + $0x78] sm:$0xff]
    %v77 = vld [vmem:[%s2] sm:$0x1]
    %v79 = vlaneseq
    %v80 = vshrl.u32 %v79, 7
    %v81 = vsub.s32 0, %v80
    %v82 = vrot.slane %v77, %v81
    %84 = vmatprep.subr.mxu0 0.0
    %85 = vmatpush1.msra.mxu0 %v61
    %86 = vmatprep.subr.mxu0 0.0
    %87 = vmatpush1.msra.mxu0 %v62
    %88 = vmatprep.subr.mxu0 0.0
    %89 = vmatpush1.msra.mxu0 %v63
    %90 = vmatprep.subr.mxu0 0.0
    %91 = vmatpush1.msra.mxu0 %v64
    %92 = vmatprep.subr.mxu0 0.0
    %93 = vmatpush1.msra.mxu0 %v65
    %94 = vmatprep.subr.mxu0 0.0
    %95 = vmatpush1.msra.mxu0 %v66
    %96 = vmatprep.subr.mxu0 0.0
    %97 = vmatpush1.msra.mxu0 %v67
    %98 = vmatprep.subr.mxu0 0.0
    %99 = vmatpush1.msra.mxu0 %v68
    %100 = vmatprep.subr.mxu0 0.0
    %101 = vmatpush1.msra.mxu0 %v69
    %102 = vmatprep.subr.mxu0 0.0
    %103 = vmatpush1.msra.mxu0 %v70
    %104 = vmatprep.subr.mxu0 0.0
    %105 = vmatpush1.msra.mxu0 %v71
    %106 = vmatprep.subr.mxu0 0.0
    %107 = vmatpush1.msra.mxu0 %v72
    %108 = vmatprep.subr.mxu0 0.0
    %109 = vmatpush1.msra.mxu0 %v73
    %110 = vmatprep.subr.mxu0 0.0
    %111 = vmatpush1.msra.mxu0 %v74
    %112 = vmatprep.subr.mxu0 0.0
    %113 = vmatpush1.msra.mxu0 %v75
    %114 = vmatprep.subr.mxu0 0.0
    %115 = vmatpush1.msra.mxu0 %v76
    %116 = vmatprep.subr.mxu0 0.0
    %117 = vmatpush1.msra.mxu0 0.0
    %118 = vmatprep.subr.mxu0 0.0
    %119 = vmatpush1.msra.mxu0 0.0
    %120 = vmatprep.subr.mxu0 0.0
    %121 = vmatpush1.msra.mxu0 0.0
    %122 = vmatprep.subr.mxu0 0.0
    %123 = vmatpush1.msra.mxu0 0.0
    %124 = vmatprep.subr.mxu0 0.0
    %125 = vmatpush1.msra.mxu0 0.0
    %126 = vmatprep.subr.mxu0 0.0
    %127 = vmatpush1.msra.mxu0 0.0
    %128 = vmatprep.subr.mxu0 0.0
    %129 = vmatpush1.msra.mxu0 0.0
    %130 = vmatprep.subr.mxu0 0.0
    %131 = vmatpush1.msra.mxu0 0.0
    %132 = vmatprep.subr.mxu0 0.0
    %133 = vmatpush1.msra.mxu0 0.0
    %134 = vmatprep.subr.mxu0 0.0
    %135 = vmatpush1.msra.mxu0 0.0
    %136 = vmatprep.subr.mxu0 0.0
    %137 = vmatpush1.msra.mxu0 0.0
    %138 = vmatprep.subr.mxu0 0.0
    %139 = vmatpush1.msra.mxu0 0.0
    %140 = vmatprep.subr.mxu0 0.0
    %141 = vmatpush1.msra.mxu0 0.0
    %142 = vmatprep.subr.mxu0 0.0
    %143 = vmatpush1.msra.mxu0 0.0
    %144 = vmatprep.subr.mxu0 0.0
    %145 = vmatpush1.msra.mxu0 0.0
    %146 = vmatprep.subr.mxu0 0.0
    %147 = vmatpush1.msra.mxu0 0.0
    %148 = vmatprep.mubr.f32.mxu0 0.0
    %149 = vmatmul.mubr.f32.gmra.mrb[0].mxu0 %v60
    %v150 = vpop.f32.mrb[0].mxu0
    %v151 = vadd.f32 %v82, %v150
    %v152 = vpop.f32.mrb[0].mxu0
    %153 = vdwg.mxu0
    %v154 = vtanh.pop %v151
    %v155 = vld [vmem:[#allocation7] sm:$0xff]
    %v156 = vld [vmem:[#allocation7 + $0x8] sm:$0xff]
    %v157 = vld [vmem:[#allocation7 + $0x10] sm:$0xff]
    %v158 = vld [vmem:[#allocation7 + $0x18] sm:$0xff]
    %v159 = vld [vmem:[#allocation7 + $0x20] sm:$0xff]
    %v160 = vld [vmem:[#allocation7 + $0x28] sm:$0xff]
    %v161 = vld [vmem:[#allocation7 + $0x30] sm:$0xff]
    %v162 = vld [vmem:[#allocation7 + $0x38] sm:$0xff]
    %v163 = vld [vmem:[#allocation7 + $0x40] sm:$0xff]
    %v164 = vld [vmem:[#allocation7 + $0x48] sm:$0xff]
    %v165 = vld [vmem:[#allocation7 + $0x50] sm:$0xff]
    %v166 = vld [vmem:[#allocation7 + $0x58] sm:$0xff]
    %v167 = vld [vmem:[#allocation7 + $0x60] sm:$0xff]
    %v168 = vld [vmem:[#allocation7 + $0x68] sm:$0xff]
    %v169 = vld [vmem:[#allocation7 + $0x70] sm:$0xff]
    %v170 = vld [vmem:[#allocation7 + $0x78] sm:$0xff]
    %v171 = vld [vmem:[%s4] sm:$0x1]
    %v173 = vlaneseq
    %v174 = vshrl.u32 %v173, 7
    %v175 = vsub.s32 0, %v174
    %v176 = vrot.slane %v171, %v175
    %178 = vmatprep.subr.mxu0 0.0
    %179 = vmatpush1.msra.mxu0 %v155
    %180 = vmatprep.subr.mxu0 0.0
    %181 = vmatpush1.msra.mxu0 %v156
    %182 = vmatprep.subr.mxu0 0.0
    %183 = vmatpush1.msra.mxu0 %v157
    %184 = vmatprep.subr.mxu0 0.0
    %185 = vmatpush1.msra.mxu0 %v158
    %186 = vmatprep.subr.mxu0 0.0
    %187 = vmatpush1.msra.mxu0 %v159
    %188 = vmatprep.subr.mxu0 0.0
    %189 = vmatpush1.msra.mxu0 %v160
    %190 = vmatprep.subr.mxu0 0.0
    %191 = vmatpush1.msra.mxu0 %v161
    %192 = vmatprep.subr.mxu0 0.0
    %193 = vmatpush1.msra.mxu0 %v162
    %194 = vmatprep.subr.mxu0 0.0
    %195 = vmatpush1.msra.mxu0 %v163
    %196 = vmatprep.subr.mxu0 0.0
    %197 = vmatpush1.msra.mxu0 %v164
    %198 = vmatprep.subr.mxu0 0.0
    %199 = vmatpush1.msra.mxu0 %v165
    %200 = vmatprep.subr.mxu0 0.0
    %201 = vmatpush1.msra.mxu0 %v166
    %202 = vmatprep.subr.mxu0 0.0
    %203 = vmatpush1.msra.mxu0 %v167
    %204 = vmatprep.subr.mxu0 0.0
    %205 = vmatpush1.msra.mxu0 %v168
    %206 = vmatprep.subr.mxu0 0.0
    %207 = vmatpush1.msra.mxu0 %v169
    %208 = vmatprep.subr.mxu0 0.0
    %209 = vmatpush1.msra.mxu0 %v170
    %210 = vmatprep.subr.mxu0 0.0
    %211 = vmatpush1.msra.mxu0 0.0
    %212 = vmatprep.subr.mxu0 0.0
    %213 = vmatpush1.msra.mxu0 0.0
    %214 = vmatprep.subr.mxu0 0.0
    %215 = vmatpush1.msra.mxu0 0.0
    %216 = vmatprep.subr.mxu0 0.0
    %217 = vmatpush1.msra.mxu0 0.0
    %218 = vmatprep.subr.mxu0 0.0
    %219 = vmatpush1.msra.mxu0 0.0
    %220 = vmatprep.subr.mxu0 0.0
    %221 = vmatpush1.msra.mxu0 0.0
    %222 = vmatprep.subr.mxu0 0.0
    %223 = vmatpush1.msra.mxu0 0.0
    %224 = vmatprep.subr.mxu0 0.0
    %225 = vmatpush1.msra.mxu0 0.0
    %226 = vmatprep.subr.mxu0 0.0
    %227 = vmatpush1.msra.mxu0 0.0
    %228 = vmatprep.subr.mxu0 0.0
    %229 = vmatpush1.msra.mxu0 0.0
    %230 = vmatprep.subr.mxu0 0.0
    %231 = vmatpush1.msra.mxu0 0.0
    %232 = vmatprep.subr.mxu0 0.0
    %233 = vmatpush1.msra.mxu0 0.0
    %234 = vmatprep.subr.mxu0 0.0
    %235 = vmatpush1.msra.mxu0 0.0
    %236 = vmatprep.subr.mxu0 0.0
    %237 = vmatpush1.msra.mxu0 0.0
    %238 = vmatprep.subr.mxu0 0.0
    %239 = vmatpush1.msra.mxu0 0.0
    %240 = vmatprep.subr.mxu0 0.0
    %241 = vmatpush1.msra.mxu0 0.0
    %242 = vmatprep.mubr.f32.mxu0 0.0
    %243 = vmatmul.mubr.f32.gmra.mrb[0].mxu0 %v154
    %v244 = vpop.f32.mrb[0].mxu0
    %v245 = vadd.f32 %v176, %v244
    %v246 = vpop.f32.mrb[0].mxu0
    %247 = vdwg.mxu0
    %248 = vst [vmem:[#allocation8] sm:$0xff] %v245
    // Predicated region
    $region34: #{tpu_custom_call.1} parent=1 // pred_check
      _
    $region35: #{tpu_custom_call.1} parent=1 // pred_check_branch
      %250 = sbr.rel (0) target = $region37
    $region36: #{tpu_custom_call.1} parent=1 // pred_region
      %s252 = ssub.s32 128, 128
      %253 = vsyncadd [#allocation4], %s252
      %s255 = sshll.u32 [#allocation8], 4
      %s256 = int_to_ptr.vmem [resolvable:$true] %s255
      %258 = dma.vmem_to_hbm [thread:$0]  %s256, 128, %s5, [#allocation4]
    $region37: #{tpu_custom_call.1} parent=1 // pred_fallthru
      _
    // Predicated region
    $region38: #{tpu_custom_call.1} parent=1 // pred_check
      _
    $region39: #{tpu_custom_call.1} parent=1 // pred_check_branch
      %260 = sbr.rel (0) target = $region41
    $region40: #{tpu_custom_call.1} parent=1 // pred_region
      %261 = dma.done [#allocation4], 128
    $region41: #{tpu_custom_call.1} parent=1 // pred_fallthru
      _
    %262 = vsyncpa [#allocation3], 1
    %263 = vsyncpa [#allocation6], 1
    %264 = vsyncpa [#allocation4], 1

</llo_original>
